<compile_context>
chip_gen: v7x
topology: tpu7x:2x2x1
jax: 0.10.0
libtpu: 0.0.40
codegen_flags: <defaults>
</compile_context>

<pallas_src>
import functools

import jax
import jax.numpy as jnp
from jax import lax
from jax.experimental import pallas as pl
from jax.experimental.pallas import tpu as pltpu


def _ls_ce_kernel(x_ref, t_ref, o_ref, *, smoothing, n_rows, n_classes, tm):
    i = pl.program_id(0)

    @pl.when(i == 0)
    def _():
        o_ref[...] = jnp.zeros_like(o_ref)

    x = x_ref[...].astype(jnp.float32)          # (tm, C) logits tile
    t = t_ref[...]                              # (tm, 1) int32 targets

    # Stable logsumexp pieces (log_prob never materialized).
    m = jnp.max(x, axis=-1, keepdims=True)                              # (tm, 1)
    lse = m + jnp.log(jnp.sum(jnp.exp(x - m), axis=-1, keepdims=True))  # (tm, 1)

    # Per-row sums of raw logits and the logit at the target class
    # (one-hot pick via iota; no gather needed).
    sum_x = jnp.sum(x, axis=-1, keepdims=True)                          # (tm, 1)
    col = lax.broadcasted_iota(jnp.int32, x.shape, 1)
    x_t = jnp.sum(jnp.where(col == t, x, 0.0),
                  axis=-1, keepdims=True)                               # (tm, 1)

    off = jnp.float32(smoothing / (n_classes - 1.0))
    on = jnp.float32(1.0 - smoothing)

    # Weights sum to 1 per row, so
    #   loss_row = -sum(weight * (x - lse)) = lse - off*sum(x) - (on-off)*x[t]
    per_row = lse - off * sum_x - (on - off) * x_t                      # (tm, 1)

    # Mask rows beyond the true batch size (partial last tile).
    row_idx = i * tm + lax.broadcasted_iota(jnp.int32, per_row.shape, 0)
    per_row = jnp.where(row_idx < n_rows, per_row, 0.0)

    o_ref[...] += jnp.sum(per_row, axis=0, keepdims=True)               # (1, 1)

    @pl.when(i == pl.num_programs(0) - 1)
    def _():
        o_ref[...] = o_ref[...] / jnp.float32(n_rows)


def label_smoothing_cross_entropy(logits: jax.Array,
                                  targets: jax.Array,
                                  smoothing: float = 0.1,
                                  tm: int | None = None) -> jax.Array:
    """logits: (..., C) float, targets: (...) int. Returns scalar f32 loss."""
    c = logits.shape[-1]
    n = 1
    for d in logits.shape[:-1]:
        n *= d
    x2d = logits.reshape(n, c)
    t2d = targets.astype(jnp.int32).reshape(n, 1)

    if tm is None:
        # ~6 MiB of logits per buffer: big enough to approach the HBM
        # roofline, small enough that the double buffer fits the default
        # scoped VMEM on v5e/v6e/v7x.
        bytes_per_row = c * x2d.dtype.itemsize
        tm = (6 * 1024 * 1024 // max(1, bytes_per_row)) // 8 * 8
        tm = max(8, min(2048, tm))
    if n <= tm:
        tm = n                      # full-dim block: exempt from the 8-row rule
    else:
        tm = max(8, (tm // 8) * 8)  # sublane-dim blocks must be multiples of 8

    grid = (pl.cdiv(n, tm),)

    kernel = functools.partial(
        _ls_ce_kernel,
        smoothing=float(smoothing), n_rows=n, n_classes=c, tm=tm)

    out = pl.pallas_call(
        kernel,
        out_shape=jax.ShapeDtypeStruct((1, 1), jnp.float32),
        grid_spec=pltpu.PrefetchScalarGridSpec(
            num_scalar_prefetch=0,
            grid=grid,
            in_specs=[
                pl.BlockSpec((tm, c), lambda i: (i, 0)),   # logits row tile
                pl.BlockSpec((tm, 1), lambda i: (i, 0)),   # targets row tile
            ],
            # Constant index_map -> output block resident across the grid
            # (serves as the f32 accumulator).
            out_specs=pl.BlockSpec((1, 1), lambda i: (0, 0)),
        ),
        compiler_params=pltpu.CompilerParams(
            dimension_semantics=("arbitrary",),            # N is a reduction axis
            vmem_limit_bytes=32 * 1024 * 1024,
        ),
    )(x2d, t2d)
    return out[0, 0]


def _ref_loss(logits, targets, smoothing):
    """Pure-JAX mirror of the PyTorch forward."""
    c = logits.shape[-1]
    lp = jax.nn.log_softmax(logits.astype(jnp.float32), axis=-1)
    onehot = jax.nn.one_hot(targets, c, dtype=jnp.float32)
    w = jnp.full(logits.shape, smoothing / (c - 1.0), dtype=jnp.float32)
    w = w * (1.0 - onehot) + (1.0 - smoothing) * onehot
    return jnp.mean(jnp.sum(-w * lp, axis=-1))


if __name__ == "__main__":
    key = jax.random.PRNGKey(0)
    k1, k2, k3, k4 = jax.random.split(key, 4)

    # Case 1: multi-tile grid with a partial (masked) last tile.
    N1, C1 = 272, 200
    logits1 = jax.random.normal(k1, (N1, C1), dtype=jnp.float32)
    targets1 = jax.random.randint(k2, (N1,), 0, C1, dtype=jnp.int32)
    loss1 = label_smoothing_cross_entropy(logits1, targets1, smoothing=0.1, tm=64)
    jax.block_until_ready(loss1)

    # Case 2: tiny single-tile shape (original module's usage scale).
    N2, C2 = 8, 32
    logits2 = jax.random.normal(k3, (N2, C2), dtype=jnp.float32)
    targets2 = jax.random.randint(k4, (N2,), 0, C2, dtype=jnp.int32)
    loss2 = label_smoothing_cross_entropy(logits2, targets2, smoothing=0.1)
    jax.block_until_ready(loss2)

    ref1 = _ref_loss(logits1, targets1, 0.1)
    ref2 = _ref_loss(logits2, targets2, 0.1)

    assert jnp.allclose(loss1, ref1, atol=1e-5, rtol=1e-4), (loss1, ref1)
    assert jnp.allclose(loss2, ref2, atol=1e-5, rtol=1e-4), (loss2, ref2)
    print("KERNEL_OK")
</pallas_src>

<mosaic_0001>
module attributes {stable_mosaic.version = 11 : i64} {
  func.func @_ls_ce_kernel(%arg0: i32, %arg1: memref<64x200xf32, #tpu.memory_space<vmem>>, %arg2: memref<64x1xi32, #tpu.memory_space<vmem>>, %arg3: memref<1x1xf32, #tpu.memory_space<vmem>>) attributes {dimension_semantics = [#tpu.dimension_semantics<arbitrary>], iteration_bounds = array<i64: 5>, scalar_prefetch = 0 : i64, scratch_operands = 0 : i64, tpu.core_type = #tpu.core_type<tc>, window_params = [{transform_indices = @transform_0, window_bounds = array<i64: 64, 200>}, {transform_indices = @transform_1, window_bounds = array<i64: 64, 1>}, {pipeline_mode = #tpu.pipeline_mode<synchronous>, transform_indices = @transform_2, window_bounds = array<i64: 1, 1>}]} {
    %c0_i32 = arith.constant 0 : i32
    %0 = arith.cmpi eq, %arg0, %c0_i32 : i32
    %1 = arith.extui %0 : i1 to i32
    %c0_i32_0 = arith.constant 0 : i32
    %2 = arith.cmpi ne, %1, %c0_i32_0 : i32
    scf.if %2 {
      %cst_18 = arith.constant 0.000000e+00 : f32
      %46 = vector.broadcast %cst_18 : f32 to vector<1x1xf32>
      %c0_19 = arith.constant 0 : index
      %c0_20 = arith.constant 0 : index
      %47 = vector.load %arg3[%c0_19, %c0_20] : memref<1x1xf32, #tpu.memory_space<vmem>>, vector<1x1xf32>
      tpu.vector_store %arg3[%c0_19, %c0_20], %46 {strides = array<i32>} : memref<1x1xf32, #tpu.memory_space<vmem>>, vector<1x1xf32>,
    } else {
    }
    %c0 = arith.constant 0 : index
    %c0_1 = arith.constant 0 : index
    %3 = vector.load %arg1[%c0, %c0_1] : memref<64x200xf32, #tpu.memory_space<vmem>>, vector<64x200xf32>
    %c0_2 = arith.constant 0 : index
    %c0_3 = arith.constant 0 : index
    %4 = vector.load %arg2[%c0_2, %c0_3] : memref<64x1xi32, #tpu.memory_space<vmem>>, vector<64x1xi32>
    %cst = arith.constant dense<0xFF800000> : vector<64xf32>
    %5 = vector.multi_reduction <maximumf>, %3, %cst [1] : vector<64x200xf32> to vector<64xf32>
    %6 = vector.shape_cast %5 : vector<64xf32> to vector<64x1xf32>
    %7 = vector.broadcast %6 : vector<64x1xf32> to vector<64x200xf32>
    %8 = arith.subf %3, %7 : vector<64x200xf32>
    %9 = math.exp %8 : vector<64x200xf32>
    %cst_4 = arith.constant dense<0.000000e+00> : vector<64xf32>
    %10 = vector.multi_reduction <add>, %9, %cst_4 [1] : vector<64x200xf32> to vector<64xf32>
    %11 = vector.shape_cast %10 : vector<64xf32> to vector<64x1xf32>
    %12 = math.log %11 : vector<64x1xf32>
    %13 = arith.addf %6, %12 : vector<64x1xf32>
    %cst_5 = arith.constant dense<0.000000e+00> : vector<64xf32>
    %14 = vector.multi_reduction <add>, %3, %cst_5 [1] : vector<64x200xf32> to vector<64xf32>
    %15 = vector.shape_cast %14 : vector<64xf32> to vector<64x1xf32>
    %16 = tpu.iota {dimensions = array<i32: 1>} : vector<64x200xi32>
    %17 = vector.broadcast %4 : vector<64x1xi32> to vector<64x200xi32>
    %18 = arith.cmpi eq, %16, %17 : vector<64x200xi32>
    %cst_6 = arith.constant 0.000000e+00 : f32
    %19 = vector.broadcast %cst_6 : f32 to vector<64x200xf32>
    %20 = arith.select %18, %3, %19 : vector<64x200xi1>, vector<64x200xf32>
    %cst_7 = arith.constant dense<0.000000e+00> : vector<64xf32>
    %21 = vector.multi_reduction <add>, %20, %cst_7 [1] : vector<64x200xf32> to vector<64xf32>
    %22 = vector.shape_cast %21 : vector<64xf32> to vector<64x1xf32>
    %cst_8 = arith.constant 5.02512557E-4 : f32
    %23 = vector.broadcast %cst_8 : f32 to vector<64x1xf32>
    %24 = arith.mulf %23, %15 : vector<64x1xf32>
    %25 = arith.subf %13, %24 : vector<64x1xf32>
    %cst_9 = arith.constant 0.899999976 : f32
    %cst_10 = arith.constant 5.02512557E-4 : f32
    %26 = arith.subf %cst_9, %cst_10 : f32
    %27 = vector.broadcast %26 : f32 to vector<64x1xf32>
    %28 = arith.mulf %27, %22 : vector<64x1xf32>
    %29 = arith.subf %25, %28 : vector<64x1xf32>
    %c64_i32 = arith.constant 64 : i32
    %30 = arith.muli %arg0, %c64_i32 : i32
    %31 = tpu.iota {dimensions = array<i32: 0>} : vector<64x1xi32>
    %32 = vector.broadcast %30 : i32 to vector<64x1xi32>
    %33 = arith.addi %32, %31 : vector<64x1xi32>
    %c272_i32 = arith.constant 272 : i32
    %34 = vector.broadcast %c272_i32 : i32 to vector<64x1xi32>
    %35 = arith.cmpi slt, %33, %34 : vector<64x1xi32>
    %cst_11 = arith.constant 0.000000e+00 : f32
    %36 = vector.broadcast %cst_11 : f32 to vector<64x1xf32>
    %37 = arith.select %35, %29, %36 : vector<64x1xi1>, vector<64x1xf32>
    %c0_12 = arith.constant 0 : index
    %c0_13 = arith.constant 0 : index
    %38 = vector.load %arg3[%c0_12, %c0_13] : memref<1x1xf32, #tpu.memory_space<vmem>>, vector<1x1xf32>
    %cst_14 = arith.constant dense<0.000000e+00> : vector<1xf32>
    %39 = vector.multi_reduction <add>, %37, %cst_14 [0] : vector<64x1xf32> to vector<1xf32>
    %40 = vector.shape_cast %39 : vector<1xf32> to vector<1x1xf32>
    %41 = arith.addf %38, %40 : vector<1x1xf32>
    %c0_15 = arith.constant 0 : index
    %c0_16 = arith.constant 0 : index
    %42 = vector.load %arg3[%c0_15, %c0_16] : memref<1x1xf32, #tpu.memory_space<vmem>>, vector<1x1xf32>
    tpu.vector_store %arg3[%c0_15, %c0_16], %41 {strides = array<i32>} : memref<1x1xf32, #tpu.memory_space<vmem>>, vector<1x1xf32>,
    %c4_i32 = arith.constant 4 : i32
    %43 = arith.cmpi eq, %arg0, %c4_i32 : i32
    %44 = arith.extui %43 : i1 to i32
    %c0_i32_17 = arith.constant 0 : i32
    %45 = arith.cmpi ne, %44, %c0_i32_17 : i32
    scf.if %45 {
      %c0_18 = arith.constant 0 : index
      %c0_19 = arith.constant 0 : index
      %46 = vector.load %arg3[%c0_18, %c0_19] : memref<1x1xf32, #tpu.memory_space<vmem>>, vector<1x1xf32>
      %cst_20 = arith.constant 2.720000e+02 : f32
      %47 = vector.broadcast %cst_20 : f32 to vector<1x1xf32>
      %48 = arith.divf %46, %47 : vector<1x1xf32>
      %c0_21 = arith.constant 0 : index
      %c0_22 = arith.constant 0 : index
      %49 = vector.load %arg3[%c0_21, %c0_22] : memref<1x1xf32, #tpu.memory_space<vmem>>, vector<1x1xf32>
      tpu.vector_store %arg3[%c0_21, %c0_22], %48 {strides = array<i32>} : memref<1x1xf32, #tpu.memory_space<vmem>>, vector<1x1xf32>,
    } else {
    }
    return
  }
  func.func @transform_0(%arg0: i32) -> (i32, i32) {
    %c0_i32 = arith.constant 0 : i32
    %c0_i32_0 = arith.constant 0 : i32
    return %arg0, %c0_i32 : i32, i32
  }
  func.func @transform_1(%arg0: i32) -> (i32, i32) {
    %c0_i32 = arith.constant 0 : i32
    %c0_i32_0 = arith.constant 0 : i32
    return %arg0, %c0_i32 : i32, i32
  }
  func.func @transform_2(%arg0: i32) -> (i32, i32) {
    %c0_i32 = arith.constant 0 : i32
    %c0_i32_0 = arith.constant 0 : i32
    %c0_i32_1 = arith.constant 0 : i32
    return %c0_i32, %c0_i32_0 : i32, i32
  }
}

</mosaic_0001>

<llo_original>
// kernel: tpu_custom_call.1
$region0: #{tpu_custom_call.1}
  #allocation0 [shape = 'u32[]', space=smem, size = 0x4, offset = 0x4, fixed_abs, tag = 'smem constant byte address 0x4 - core index']
  #allocation1 [shape = 'u32[144,128]{1,0:T(1,128)}', space=vmem, size = 0x12000, scoped, tag = 'internal scratch']
  %s0 = inlined_call_operand.hbm [shape: f32[272,200], index: 0, kind: input, shape index: {}]
  %s1 = inlined_call_operand.vmem [shape: s32[272,1], index: 1, kind: input, shape index: {}]
  %s2 = inlined_call_operand.hbm [shape: f32[1,1], index: 2, kind: output, shape index: {}]
  %s3 = sld [smem:[#allocation0]]
  $region53: #{tpu_custom_call.1} parent=0
    _
  %s5 = ssub.s32 1, %s3
  %s6 = scalar_select 0, %s5, %s3
  $region1: #{tpu_custom_call.1} parent=0
    #allocation2 [shape = 'u8[131072]{0}', space=vmem, size = 0x20000, scoped, tag = 'input window, operand 0']
    #allocation3 [shape = 's32[2]{0}', space=sflag, size = 0x8, scoped, tag = 'scoped memory for tpu_custom_call.1']
    #allocation4 [shape = 's32[2]{0}', space=sflag, size = 0x8, scoped, tag = 'scoped memory for tpu_custom_call.1']
    #allocation5 [shape = 'u8[512]{0}', space=vmem, size = 0x400, scoped, tag = 'output window, operand 0, single buffered']
    %7 = vsyncpa [#allocation3], 0
    %s8 = scalar_lea.sflag [#allocation3], 1
    %9 = vsyncpa %s8, 0
    %10 = vsyncpa [#allocation4], 0
    loop: start=0, step=1, limit=7
    $region2: #{tpu_custom_call.1} parent=1 // loop_pre_header
      _
    $region3: #{tpu_custom_call.1} parent=1 // loop_header
      %s12 = sphi 0, %s16
      %p13 = scmp.ge.s32.totalorder %s12, 7
      %s22 = sphi 0, %s24
      %s25 = sphi 0, %s22
      %s26 = sphi 0, %s25
      %s42 = sphi 0, %s26
      %s48 = sphi 0, %s50
      %s51 = sphi 0, %s48
      %s52 = sphi 0, %s51
      %s68 = sphi 0, %s52
      %s72 = sphi 0, %s72
      %s74 = sphi 0, %s72
      %s75 = sphi 0, %s74
      %s89 = sphi 0, %s75
    $region4: #{tpu_custom_call.1} parent=1 // loop_header_branch
      %15 = sbr.rel (%p13) target = $region8
    $region5: #{tpu_custom_call.1} parent=1 // loop_body
      %s17 = ssub.s32 %s12, 1
      %s18 = ssub.s32 %s12, 2
      %s19 = sadd.s32 %s12, 1
      %s20 = ssub.s32 %s12, %s19
      %p21 = scmp.eq.s32.totalorder %s20, 0
      %s23 = sadd.s32 %s22, 1
      %s24 = scalar_select %p21, %s22, %s23
      %p27 = pneg %p21
      %p28 = scmp.eq.s32.totalorder %s12, 4
      %p29 = por %p27, %p28
      %p30 = scmp.ne.s32.totalorder %s22, %s25
      %p31 = scmp.eq.s32.totalorder %s12, 0
      %p32 = por %p30, %p31
      %p33 = scmp.ne.s32.totalorder %s22, %s25
      %p34 = scmp.eq.s32.totalorder %s17, 4
      %p35 = por %p33, %p34
      %p36 = scmp.ne.s32.totalorder %s25, %s26
      %p37 = scmp.eq.s32.totalorder %s17, 0
      %p38 = por %p36, %p37
      %p39 = scmp.ne.s32.totalorder %s25, %s26
      %p40 = scmp.eq.s32.totalorder %s18, 4
      %p41 = por %p39, %p40
      %p43 = scmp.ne.s32.totalorder %s26, %s42
      %p44 = scmp.eq.s32.totalorder %s18, 0
      %p45 = por %p43, %p44
      %s46 = ssub.s32 %s12, %s19
      %p47 = scmp.eq.s32.totalorder %s46, 0
      %s49 = sadd.s32 %s48, 1
      %s50 = scalar_select %p47, %s48, %s49
      %p53 = pneg %p47
      %p54 = scmp.eq.s32.totalorder %s12, 4
      %p55 = por %p53, %p54
      %p56 = scmp.ne.s32.totalorder %s48, %s51
      %p57 = scmp.eq.s32.totalorder %s12, 0
      %p58 = por %p56, %p57
      %p59 = scmp.ne.s32.totalorder %s48, %s51
      %p60 = scmp.eq.s32.totalorder %s17, 4
      %p61 = por %p59, %p60
      %p62 = scmp.ne.s32.totalorder %s51, %s52
      %p63 = scmp.eq.s32.totalorder %s17, 0
      %p64 = por %p62, %p63
      %p65 = scmp.ne.s32.totalorder %s51, %s52
      %p66 = scmp.eq.s32.totalorder %s18, 4
      %p67 = por %p65, %p66
      %p69 = scmp.ne.s32.totalorder %s52, %s68
      %p70 = scmp.eq.s32.totalorder %s18, 0
      %p71 = por %p69, %p70
      %s73 = sadd.s32 %s72, 1
      %p76 = scmp.eq.s32.totalorder %s12, 4
      %p77 = scmp.ne.s32.totalorder %s72, %s74
      %p78 = scmp.eq.s32.totalorder %s12, 0
      %p79 = por %p77, %p78
      %p80 = scmp.ne.s32.totalorder %s72, %s74
      %p81 = scmp.eq.s32.totalorder %s17, 4
      %p82 = por %p80, %p81
      %p83 = scmp.ne.s32.totalorder %s74, %s75
      %p84 = scmp.eq.s32.totalorder %s17, 0
      %p85 = por %p83, %p84
      %p86 = scmp.ne.s32.totalorder %s74, %s75
      %p87 = scmp.eq.s32.totalorder %s18, 4
      %p88 = por %p86, %p87
      %p90 = scmp.ne.s32.totalorder %s75, %s89
      %p91 = scmp.eq.s32.totalorder %s18, 0
      %p92 = por %p90, %p91
      %p93 = scmp.le.s32.totalorder 1, %s12
      %p94 = scmp.lt.s32.totalorder %s12, 6
      %p95 = pnand %p93, %p94
      %p96 = pneg %p95
      // Predicated region
      $region9: #{tpu_custom_call.1} parent=5 // pred_check
        _
      $region10: #{tpu_custom_call.1} parent=5 // pred_check_branch
        %98 = sbr.rel (%p95) target = $region12
      $region11: #{tpu_custom_call.1} parent=5 // pred_region
        %s99 = ssub.s32 %s12, 1
      $region12: #{tpu_custom_call.1} parent=5 // pred_fallthru
        _
      %p100 = scmp.lt.s32.totalorder %s12, 5
      // Predicated region
      $region13: #{tpu_custom_call.1} parent=5 // pred_check
        %p101 = pneg %p100
      $region14: #{tpu_custom_call.1} parent=5 // pred_check_branch
        %103 = sbr.rel (%p101) target = $region16
      $region15: #{tpu_custom_call.1} parent=5 // pred_region
        // Predicated region
        $region17: #{tpu_custom_call.1} parent=15 // pred_check
          %p104 = pneg %p32
        $region18: #{tpu_custom_call.1} parent=15 // pred_check_branch
          %106 = sbr.rel (%p104) target = $region20
        $region19: #{tpu_custom_call.1} parent=15 // pred_region
          %s107 = sand.u32 %s22, 1
          %s108 = scalar_lea.sflag [#allocation3], %s107
          %s109 = sand.u32 %s22, 1
          %s110 = smul.addr %s109, 128
          %s111 = scalar_lea.vmem [#allocation2], %s110
          %s112 = smul.u32 8, %s12
          %s113 = ssub.s32 34, %s112
          %p114 = scmp.lt.s32.totalorder %s113, 8
          %s115 = scalar_select %p114, %s113, 8
          %s116 = smul.u32 128, %s115
          %s117 = smul.u32 %s116, 2
          %s119 = ssub.s32 2048, %s117
          %120 = vsyncadd %s108, %s119
          %p121 = scmp.ne.s32.totalorder 0, %s117
          %s122 = smul.addr %s112, 2
          %s123 = smul.addr %s122, 128
          %s124 = scalar_lea.hbm %s0, %s123
          %s125 = smul.u32 16, %s115
          %s126 = sshll.u32 %s111, 4
          %s127 = int_to_ptr.vmem [resolvable:$true] %s126
          %s128 = sshll.u32 %s125, 4
          %132 = dma.hbm_to_vmem [thread:$0]  (%p121), %s124, %s128, %s127, %s108, 256, 256, 16
        $region20: #{tpu_custom_call.1} parent=15 // pred_fallthru
          _
        // Predicated region
        $region21: #{tpu_custom_call.1} parent=15 // pred_check
          %p133 = pneg %p58
        $region22: #{tpu_custom_call.1} parent=15 // pred_check_branch
          %135 = sbr.rel (%p133) target = $region24
        $region23: #{tpu_custom_call.1} parent=15 // pred_region
          %s136 = smul.u32 8, %s12
          %s137 = ssub.s32 34, %s136
          %p138 = scmp.lt.s32.totalorder %s137, 8
          %s139 = scalar_select %p138, %s137, 8
          %s140 = smul.u32 128, %s139
          %p141 = scmp.lt.s32.totalorder %s136, 33
          %s142 = scalar_select %p141, %s136, 33
          %s143 = smul.addr %s142, 8
          %s144 = scalar_lea.vmem %s1, %s143
          %s145 = smul.u32 8, %s12
          %s146 = ssub.s32 34, %s145
          %p147 = scmp.lt.s32.totalorder %s146, 8
          %s148 = scalar_select %p147, %s146, 8
          %s149 = smul.u32 128, %s148
        $region24: #{tpu_custom_call.1} parent=15 // pred_fallthru
          _
      $region16: #{tpu_custom_call.1} parent=5 // pred_fallthru
        _
      %p150 = scmp.le.s32.totalorder 1, %s12
      %p151 = scmp.lt.s32.totalorder %s12, 6
      %p152 = pnand %p150, %p151
      %p153 = pneg %p152
      // Predicated region
      $region25: #{tpu_custom_call.1} parent=5 // pred_check
        _
      $region26: #{tpu_custom_call.1} parent=5 // pred_check_branch
        %155 = sbr.rel (%p152) target = $region28
      $region27: #{tpu_custom_call.1} parent=5 // pred_region
        %s156 = ssub.s32 %s12, 1
        %s157 = sand.u32 %s25, 1
        %s158 = scalar_lea.sflag [#allocation3], %s157
        %s159 = sand.u32 %s25, 1
        %s160 = smul.addr %s159, 128
        %s161 = scalar_lea.vmem [#allocation2], %s160
        // Predicated region
        $region29: #{tpu_custom_call.1} parent=27 // pred_check
          %p162 = pneg %p38
        $region30: #{tpu_custom_call.1} parent=27 // pred_check_branch
          %164 = sbr.rel (%p162) target = $region32
        $region31: #{tpu_custom_call.1} parent=27 // pred_region
          %165 = dma.done %s158, 2048
        $region32: #{tpu_custom_call.1} parent=27 // pred_fallthru
          _
        %s166 = sand.u32 %s25, 1
        %s167 = scalar_lea.sflag [#allocation3], %s166
        %s168 = sand.u32 %s25, 1
        %s169 = smul.addr %s168, 128
        %s170 = scalar_lea.vmem [#allocation2], %s169
        %p171 = pneg %p38
        %p172 = pneg %p35
        %s173 = smul.u32 8, %s17
        %s174 = ssub.s32 34, %s173
        %p175 = scmp.lt.s32.totalorder %s174, 8
        %s176 = scalar_select %p175, %s174, 8
        %s177 = smul.u32 128, %s176
        %p178 = scmp.lt.s32.totalorder %s173, 33
        %s179 = scalar_select %p178, %s173, 33
        %s180 = smul.addr %s179, 8
        %s181 = scalar_lea.vmem %s1, %s180
        %p182 = pneg %p64
        %p183 = pneg %p61
        %p184 = pneg %p85
        %p185 = pneg %p82
        %s186 = smul.u32 8, %s17
        %s187 = ssub.s32 34, %s186
        %p188 = scmp.lt.s32.totalorder %s187, 8
        %s189 = scalar_select %p188, %s187, 8
        %s190 = smul.u32 128, %s189
        %s191 = smul.u32 %s190, 2
        %s192 = smul.u32 8, %s17
        %s193 = ssub.s32 34, %s192
        %p194 = scmp.lt.s32.totalorder %s193, 8
        %s195 = scalar_select %p194, %s193, 8
        %s196 = smul.u32 128, %s195
        %p197 = scmp.lt.s32.totalorder %s192, 33
        %s198 = scalar_select %p197, %s192, 33
        %s199 = smul.addr %s198, 8
        %s200 = scalar_lea.vmem %s1, %s199
        %s201 = smul.u32 8, %s17
        %s202 = ssub.s32 34, %s201
        %p203 = scmp.lt.s32.totalorder %s202, 8
        %s204 = scalar_select %p203, %s202, 8
        %s205 = smul.u32 128, %s204
        %p206 = scmp.eq.s32.totalorder %s17, 0
        // Predicated region
        $region33: #{tpu_custom_call.1} parent=27 // pred_check
          %p207 = pneg %p206
        $region34: #{tpu_custom_call.1} parent=27 // pred_check_branch
          %209 = sbr.rel (%p207) target = $region36
        $region35: #{tpu_custom_call.1} parent=27 // pred_region
          %vm210 = vcmask 0
          %211 = vst.msk [vmem:[#allocation5] sm:$0x1] %vm210, 0.0
        $region36: #{tpu_custom_call.1} parent=27 // pred_fallthru
          _
        %v212 = vld [vmem:[%s161] sm:$0xff]
        %v213 = vld [vmem:[%s161 + $0x8] sm:$0xff]
        %v214 = vld [vmem:[%s161 + $0x10] sm:$0xff]
        %v215 = vld [vmem:[%s161 + $0x18] sm:$0xff]
        %v216 = vld [vmem:[%s161 + $0x20] sm:$0xff]
        %v217 = vld [vmem:[%s161 + $0x28] sm:$0xff]
        %v218 = vld [vmem:[%s161 + $0x30] sm:$0xff]
        %v219 = vld [vmem:[%s161 + $0x38] sm:$0xff]
        %v220 = vld [vmem:[%s161 + $0x40] sm:$0xff]
        %v221 = vld [vmem:[%s161 + $0x48] sm:$0xff]
        %v222 = vld [vmem:[%s161 + $0x50] sm:$0xff]
        %v223 = vld [vmem:[%s161 + $0x58] sm:$0xff]
        %v224 = vld [vmem:[%s161 + $0x60] sm:$0xff]
        %v225 = vld [vmem:[%s161 + $0x68] sm:$0xff]
        %v226 = vld [vmem:[%s161 + $0x70] sm:$0xff]
        %v227 = vld [vmem:[%s161 + $0x78] sm:$0xff]
        %v228 = vld [vmem:[%s200] sm:$0xff]
        %v229 = vld [vmem:[%s200 + $0x8] sm:$0xff]
        %v230 = vld [vmem:[%s200 + $0x10] sm:$0xff]
        %v231 = vld [vmem:[%s200 + $0x18] sm:$0xff]
        %v232 = vld [vmem:[%s200 + $0x20] sm:$0xff]
        %v233 = vld [vmem:[%s200 + $0x28] sm:$0xff]
        %v234 = vld [vmem:[%s200 + $0x30] sm:$0xff]
        %v235 = vld [vmem:[%s200 + $0x38] sm:$0xff]
        %vm236 = vcmask 588800
        %v237 = vsel %vm236, %v213, -inf
        %v238 = vmax.f32 %v212, %v237
        %239 = vmax.xlane.f32.xlu0 %v238
        %v240 = vpop.xlane.xlu0 %239
        %v241 = vsel %vm236, %v215, -inf
        %v242 = vmax.f32 %v214, %v241
        %243 = vmax.xlane.f32.xlu0 %v242
        %v244 = vpop.xlane.xlu0 %243
        %v245 = vsel %vm236, %v217, -inf
        %v246 = vmax.f32 %v216, %v245
        %247 = vmax.xlane.f32.xlu0 %v246
        %v248 = vpop.xlane.xlu0 %247
        %v249 = vsel %vm236, %v219, -inf
        %v250 = vmax.f32 %v218, %v249
        %251 = vmax.xlane.f32.xlu0 %v250
        %v252 = vpop.xlane.xlu0 %251
        %v253 = vsel %vm236, %v221, -inf
        %v254 = vmax.f32 %v220, %v253
        %255 = vmax.xlane.f32.xlu0 %v254
        %v256 = vpop.xlane.xlu0 %255
        %v257 = vsel %vm236, %v223, -inf
        %v258 = vmax.f32 %v222, %v257
        %259 = vmax.xlane.f32.xlu0 %v258
        %v260 = vpop.xlane.xlu0 %259
        %v261 = vsel %vm236, %v225, -inf
        %v262 = vmax.f32 %v224, %v261
        %263 = vmax.xlane.f32.xlu0 %v262
        %v264 = vpop.xlane.xlu0 %263
        %v265 = vsel %vm236, %v227, -inf
        %v266 = vmax.f32 %v226, %v265
        %267 = vmax.xlane.f32.xlu0 %v266
        %v268 = vpop.xlane.xlu0 %267
        %v269 = vsub.f32 %v212, %v240
        %v270 = vsub.f32 %v213, %v240
        %v271 = vsub.f32 %v214, %v244
        %v272 = vsub.f32 %v215, %v244
        %v273 = vsub.f32 %v216, %v248
        %v274 = vsub.f32 %v217, %v248
        %v275 = vsub.f32 %v218, %v252
        %v276 = vsub.f32 %v219, %v252
        %v277 = vsub.f32 %v220, %v256
        %v278 = vsub.f32 %v221, %v256
        %v279 = vsub.f32 %v222, %v260
        %v280 = vsub.f32 %v223, %v260
        %v281 = vsub.f32 %v224, %v264
        %v282 = vsub.f32 %v225, %v264
        %v283 = vsub.f32 %v226, %v268
        %v284 = vsub.f32 %v227, %v268
        %v285 = vmul.f32 %v269, 1.442695
        %v286 = vpow.pop %v285
        %v287 = vmul.f32 %v270, 1.442695
        %v288 = vpow.pop %v287
        %v289 = vmul.f32 %v271, 1.442695
        %v290 = vpow.pop %v289
        %v291 = vmul.f32 %v272, 1.442695
        %v292 = vpow.pop %v291
        %v293 = vmul.f32 %v273, 1.442695
        %v294 = vpow.pop %v293
        %v295 = vmul.f32 %v274, 1.442695
        %v296 = vpow.pop %v295
        %v297 = vmul.f32 %v275, 1.442695
        %v298 = vpow.pop %v297
        %v299 = vmul.f32 %v276, 1.442695
        %v300 = vpow.pop %v299
        %v301 = vmul.f32 %v277, 1.442695
        %v302 = vpow.pop %v301
        %v303 = vmul.f32 %v278, 1.442695
        %v304 = vpow.pop %v303
        %v305 = vmul.f32 %v279, 1.442695
        %v306 = vpow.pop %v305
        %v307 = vmul.f32 %v280, 1.442695
        %v308 = vpow.pop %v307
        %v309 = vmul.f32 %v281, 1.442695
        %v310 = vpow.pop %v309
        %v311 = vmul.f32 %v282, 1.442695
        %v312 = vpow.pop %v311
        %v313 = vmul.f32 %v283, 1.442695
        %v314 = vpow.pop %v313
        %v315 = vmul.f32 %v284, 1.442695
        %v316 = vpow.pop %v315
        %v317 = vsel %vm236, %v288, 0.0
        %v318 = vadd.f32 %v286, %v317
        %319 = vadd.xlane.f32.xlu0 %v318
        %v320 = vpop.xlane.xlu0 %319
        %v321 = vsel %vm236, %v292, 0.0
        %v322 = vadd.f32 %v290, %v321
        %323 = vadd.xlane.f32.xlu0 %v322
        %v324 = vpop.xlane.xlu0 %323
        %v325 = vsel %vm236, %v296, 0.0
        %v326 = vadd.f32 %v294, %v325
        %327 = vadd.xlane.f32.xlu0 %v326
        %v328 = vpop.xlane.xlu0 %327
        %v329 = vsel %vm236, %v300, 0.0
        %v330 = vadd.f32 %v298, %v329
        %331 = vadd.xlane.f32.xlu0 %v330
        %v332 = vpop.xlane.xlu0 %331
        %v333 = vsel %vm236, %v304, 0.0
        %v334 = vadd.f32 %v302, %v333
        %335 = vadd.xlane.f32.xlu0 %v334
        %v336 = vpop.xlane.xlu0 %335
        %v337 = vsel %vm236, %v308, 0.0
        %v338 = vadd.f32 %v306, %v337
        %339 = vadd.xlane.f32.xlu0 %v338
        %v340 = vpop.xlane.xlu0 %339
        %v341 = vsel %vm236, %v312, 0.0
        %v342 = vadd.f32 %v310, %v341
        %343 = vadd.xlane.f32.xlu0 %v342
        %v344 = vpop.xlane.xlu0 %343
        %v345 = vsel %vm236, %v316, 0.0
        %v346 = vadd.f32 %v314, %v345
        %347 = vadd.xlane.f32.xlu0 %v346
        %v348 = vpop.xlane.xlu0 %347
        %v349 = vlog2.pop %v320
        %v350 = vmul.f32 %v349, 0.6931472
        %v351 = vlog2.pop %v324
        %v352 = vmul.f32 %v351, 0.6931472
        %v353 = vlog2.pop %v328
        %v354 = vmul.f32 %v353, 0.6931472
        %v355 = vlog2.pop %v332
        %v356 = vmul.f32 %v355, 0.6931472
        %v357 = vlog2.pop %v336
        %v358 = vmul.f32 %v357, 0.6931472
        %v359 = vlog2.pop %v340
        %v360 = vmul.f32 %v359, 0.6931472
        %v361 = vlog2.pop %v344
        %v362 = vmul.f32 %v361, 0.6931472
        %v363 = vlog2.pop %v348
        %v364 = vmul.f32 %v363, 0.6931472
        %v365 = vadd.f32 %v240, %v350
        %v366 = vadd.f32 %v244, %v352
        %v367 = vadd.f32 %v248, %v354
        %v368 = vadd.f32 %v252, %v356
        %v369 = vadd.f32 %v256, %v358
        %v370 = vadd.f32 %v260, %v360
        %v371 = vadd.f32 %v264, %v362
        %v372 = vadd.f32 %v268, %v364
        %v373 = vsel %vm236, %v213, 0.0
        %v374 = vadd.f32 %v212, %v373
        %375 = vadd.xlane.f32.xlu0 %v374
        %v376 = vpop.xlane.xlu0 %375
        %v377 = vsel %vm236, %v215, 0.0
        %v378 = vadd.f32 %v214, %v377
        %379 = vadd.xlane.f32.xlu0 %v378
        %v380 = vpop.xlane.xlu0 %379
        %v381 = vsel %vm236, %v217, 0.0
        %v382 = vadd.f32 %v216, %v381
        %383 = vadd.xlane.f32.xlu0 %v382
        %v384 = vpop.xlane.xlu0 %383
        %v385 = vsel %vm236, %v219, 0.0
        %v386 = vadd.f32 %v218, %v385
        %387 = vadd.xlane.f32.xlu0 %v386
        %v388 = vpop.xlane.xlu0 %387
        %v389 = vsel %vm236, %v221, 0.0
        %v390 = vadd.f32 %v220, %v389
        %391 = vadd.xlane.f32.xlu0 %v390
        %v392 = vpop.xlane.xlu0 %391
        %v393 = vsel %vm236, %v223, 0.0
        %v394 = vadd.f32 %v222, %v393
        %395 = vadd.xlane.f32.xlu0 %v394
        %v396 = vpop.xlane.xlu0 %395
        %v397 = vsel %vm236, %v225, 0.0
        %v398 = vadd.f32 %v224, %v397
        %399 = vadd.xlane.f32.xlu0 %v398
        %v400 = vpop.xlane.xlu0 %399
        %v401 = vsel %vm236, %v227, 0.0
        %v402 = vadd.f32 %v226, %v401
        %403 = vadd.xlane.f32.xlu0 %v402
        %v404 = vpop.xlane.xlu0 %403
        %v405 = vlaneseq
        %v406 = vand.u32 %v405, 127
        %v407 = vadd.s32 %v406, 128
        %408 = vset.pattern.permute.xlu0 0
        %409 = vperm.xlu0 %408, %v228
        %v410 = vpop.permute.xlu0 %409
        %411 = vset.pattern.permute.xlu0 0
        %412 = vperm.xlu0 %411, %v229
        %v413 = vpop.permute.xlu0 %412
        %414 = vset.pattern.permute.xlu0 0
        %415 = vperm.xlu0 %414, %v230
        %v416 = vpop.permute.xlu0 %415
        %417 = vset.pattern.permute.xlu0 0
        %418 = vperm.xlu0 %417, %v231
        %v419 = vpop.permute.xlu0 %418
        %420 = vset.pattern.permute.xlu0 0
        %421 = vperm.xlu0 %420, %v232
        %v422 = vpop.permute.xlu0 %421
        %423 = vset.pattern.permute.xlu0 0
        %424 = vperm.xlu0 %423, %v233
        %v425 = vpop.permute.xlu0 %424
        %426 = vset.pattern.permute.xlu0 0
        %427 = vperm.xlu0 %426, %v234
        %v428 = vpop.permute.xlu0 %427
        %429 = vset.pattern.permute.xlu0 0
        %430 = vperm.xlu0 %429, %v235
        %v431 = vpop.permute.xlu0 %430
        %vm432 = vcmp.eq.s32.totalorder %v406, %v410
        %vm433 = vcmp.eq.s32.totalorder %v407, %v410
        %vm434 = vcmp.eq.s32.totalorder %v406, %v413
        %vm435 = vcmp.eq.s32.totalorder %v407, %v413
        %vm436 = vcmp.eq.s32.totalorder %v406, %v416
        %vm437 = vcmp.eq.s32.totalorder %v407, %v416
        %vm438 = vcmp.eq.s32.totalorder %v406, %v419
        %vm439 = vcmp.eq.s32.totalorder %v407, %v419
        %vm440 = vcmp.eq.s32.totalorder %v406, %v422
        %vm441 = vcmp.eq.s32.totalorder %v407, %v422
        %vm442 = vcmp.eq.s32.totalorder %v406, %v425
        %vm443 = vcmp.eq.s32.totalorder %v407, %v425
        %vm444 = vcmp.eq.s32.totalorder %v406, %v428
        %vm445 = vcmp.eq.s32.totalorder %v407, %v428
        %vm446 = vcmp.eq.s32.totalorder %v406, %v431
        %vm447 = vcmp.eq.s32.totalorder %v407, %v431
        %v448 = vsel %vm432, %v212, 0.0
        %v449 = vsel %vm433, %v213, 0.0
        %v450 = vsel %vm434, %v214, 0.0
        %v451 = vsel %vm435, %v215, 0.0
        %v452 = vsel %vm436, %v216, 0.0
        %v453 = vsel %vm437, %v217, 0.0
        %v454 = vsel %vm438, %v218, 0.0
        %v455 = vsel %vm439, %v219, 0.0
        %v456 = vsel %vm440, %v220, 0.0
        %v457 = vsel %vm441, %v221, 0.0
        %v458 = vsel %vm442, %v222, 0.0
        %v459 = vsel %vm443, %v223, 0.0
        %v460 = vsel %vm444, %v224, 0.0
        %v461 = vsel %vm445, %v225, 0.0
        %v462 = vsel %vm446, %v226, 0.0
        %v463 = vsel %vm447, %v227, 0.0
        %v464 = vsel %vm236, %v449, 0.0
        %v465 = vadd.f32 %v448, %v464
        %466 = vadd.xlane.f32.xlu0 %v465
        %v467 = vpop.xlane.xlu0 %466
        %v468 = vsel %vm236, %v451, 0.0
        %v469 = vadd.f32 %v450, %v468
        %470 = vadd.xlane.f32.xlu0 %v469
        %v471 = vpop.xlane.xlu0 %470
        %v472 = vsel %vm236, %v453, 0.0
        %v473 = vadd.f32 %v452, %v472
        %474 = vadd.xlane.f32.xlu0 %v473
        %v475 = vpop.xlane.xlu0 %474
        %v476 = vsel %vm236, %v455, 0.0
        %v477 = vadd.f32 %v454, %v476
        %478 = vadd.xlane.f32.xlu0 %v477
        %v479 = vpop.xlane.xlu0 %478
        %v480 = vsel %vm236, %v457, 0.0
        %v481 = vadd.f32 %v456, %v480
        %482 = vadd.xlane.f32.xlu0 %v481
        %v483 = vpop.xlane.xlu0 %482
        %v484 = vsel %vm236, %v459, 0.0
        %v485 = vadd.f32 %v458, %v484
        %486 = vadd.xlane.f32.xlu0 %v485
        %v487 = vpop.xlane.xlu0 %486
        %v488 = vsel %vm236, %v461, 0.0
        %v489 = vadd.f32 %v460, %v488
        %490 = vadd.xlane.f32.xlu0 %v489
        %v491 = vpop.xlane.xlu0 %490
        %v492 = vsel %vm236, %v463, 0.0
        %v493 = vadd.f32 %v462, %v492
        %494 = vadd.xlane.f32.xlu0 %v493
        %v495 = vpop.xlane.xlu0 %494
        %v496 = vmul.f32 %v376, 0.00050251256
        %v497 = vmul.f32 %v380, 0.00050251256
        %v498 = vmul.f32 %v384, 0.00050251256
        %v499 = vmul.f32 %v388, 0.00050251256
        %v500 = vmul.f32 %v392, 0.00050251256
        %v501 = vmul.f32 %v396, 0.00050251256
        %v502 = vmul.f32 %v400, 0.00050251256
        %v503 = vmul.f32 %v404, 0.00050251256
        %v504 = vsub.f32 %v365, %v496
        %v505 = vsub.f32 %v366, %v497
        %v506 = vsub.f32 %v367, %v498
        %v507 = vsub.f32 %v368, %v499
        %v508 = vsub.f32 %v369, %v500
        %v509 = vsub.f32 %v370, %v501
        %v510 = vsub.f32 %v371, %v502
        %v511 = vsub.f32 %v372, %v503
        %v512 = vmul.f32 %v467, 0.89949745
        %v513 = vmul.f32 %v471, 0.89949745
        %v514 = vmul.f32 %v475, 0.89949745
        %v515 = vmul.f32 %v479, 0.89949745
        %v516 = vmul.f32 %v483, 0.89949745
        %v517 = vmul.f32 %v487, 0.89949745
        %v518 = vmul.f32 %v491, 0.89949745
        %v519 = vmul.f32 %v495, 0.89949745
        %v520 = vsub.f32 %v504, %v512
        %v521 = vsub.f32 %v505, %v513
        %v522 = vsub.f32 %v506, %v514
        %v523 = vsub.f32 %v507, %v515
        %v524 = vsub.f32 %v508, %v516
        %v525 = vsub.f32 %v509, %v517
        %v526 = vsub.f32 %v510, %v518
        %v527 = vsub.f32 %v511, %v519
        %s528 = smul.u32 %s17, 64
        %v529 = vlaneseq
        %v530 = vshrl.u32 %v529, 7
        %v531 = vadd.s32 %v530, 8
        %v532 = vadd.s32 %v530, 16
        %v533 = vadd.s32 %v530, 24
        %v534 = vadd.s32 %v530, 32
        %v535 = vadd.s32 %v530, 40
        %v536 = vadd.s32 %v530, 48
        %v537 = vadd.s32 %v530, 56
        %v538 = vstv %s528
        %v539 = vadd.s32 %v538, %v530
        %v540 = vadd.s32 %v538, %v531
        %v541 = vadd.s32 %v538, %v532
        %v542 = vadd.s32 %v538, %v533
        %v543 = vadd.s32 %v538, %v534
        %v544 = vadd.s32 %v538, %v535
        %v545 = vadd.s32 %v538, %v536
        %v546 = vadd.s32 %v538, %v537
        %vm547 = vcmp.lt.s32.totalorder %v539, 272
        %vm548 = vcmp.lt.s32.totalorder %v540, 272
        %vm549 = vcmp.lt.s32.totalorder %v541, 272
        %vm550 = vcmp.lt.s32.totalorder %v542, 272
        %vm551 = vcmp.lt.s32.totalorder %v543, 272
        %vm552 = vcmp.lt.s32.totalorder %v544, 272
        %vm553 = vcmp.lt.s32.totalorder %v545, 272
        %vm554 = vcmp.lt.s32.totalorder %v546, 272
        %v555 = vsel %vm547, %v520, 0.0
        %v556 = vsel %vm548, %v521, 0.0
        %v557 = vsel %vm549, %v522, 0.0
        %v558 = vsel %vm550, %v523, 0.0
        %v559 = vsel %vm551, %v524, 0.0
        %v560 = vsel %vm552, %v525, 0.0
        %v561 = vsel %vm553, %v526, 0.0
        %v562 = vsel %vm554, %v527, 0.0
        %v563 = vld [vmem:[#allocation5] sm:$0x1]
        %v564 = vadd.f32 %v555, %v556
        %v565 = vadd.f32 %v564, %v557
        %v566 = vadd.f32 %v565, %v558
        %v567 = vadd.f32 %v566, %v559
        %v568 = vadd.f32 %v567, %v560
        %v569 = vadd.f32 %v568, %v561
        %v570 = vadd.f32 %v569, %v562
        %v571 = vrot.slane %v570, 4
        %v572 = vadd.f32 %v570, %v571
        %v573 = vrot.slane %v572, 2
        %v574 = vadd.f32 %v572, %v573
        %v575 = vrot.slane %v574, 1
        %v576 = vadd.f32 %v574, %v575
        %v577 = vadd.f32 %v563, %v576
        %vm578 = vcmask 0
        %579 = vst.msk [vmem:[#allocation5] sm:$0x1] %vm578, %v577
        %p580 = scmp.eq.s32.totalorder %s17, 4
        // Predicated region
        $region37: #{tpu_custom_call.1} parent=27 // pred_check
          %p581 = pneg %p580
        $region38: #{tpu_custom_call.1} parent=27 // pred_check_branch
          %583 = sbr.rel (%p581) target = $region40
        $region39: #{tpu_custom_call.1} parent=27 // pred_region
          %v584 = vld [vmem:[#allocation5] sm:$0x1]
          %v585 = vrcp.pop 272.0
          %v586 = vmul.f32 %v584, %v585
          %587 = vst.msk [vmem:[#allocation5] sm:$0x1] %vm578, %v586
        $region40: #{tpu_custom_call.1} parent=27 // pred_fallthru
          _
        // Predicated region
        $region41: #{tpu_custom_call.1} parent=27 // pred_check
          %p588 = pneg %p82
        $region42: #{tpu_custom_call.1} parent=27 // pred_check_branch
          %590 = sbr.rel (%p588) target = $region44
        $region43: #{tpu_custom_call.1} parent=27 // pred_region
          %s592 = ssub.s32 16, 16
          %593 = vsyncadd [#allocation4], %s592
          %s595 = sshll.u32 [#allocation5], 4
          %s596 = int_to_ptr.vmem [resolvable:$true] %s595
          %598 = dma.vmem_to_hbm [thread:$0]  %s596, 16, %s2, [#allocation4]
        $region44: #{tpu_custom_call.1} parent=27 // pred_fallthru
          _
        // Predicated region
        $region45: #{tpu_custom_call.1} parent=27 // pred_check
          %p599 = pneg %p82
        $region46: #{tpu_custom_call.1} parent=27 // pred_check_branch
          %601 = sbr.rel (%p599) target = $region48
        $region47: #{tpu_custom_call.1} parent=27 // pred_region
          %602 = dma.done [#allocation4], 16
        $region48: #{tpu_custom_call.1} parent=27 // pred_fallthru
          _
      $region28: #{tpu_custom_call.1} parent=5 // pred_fallthru
        _
      %p603 = scmp.le.s32.totalorder 2, %s12
      // Predicated region
      $region49: #{tpu_custom_call.1} parent=5 // pred_check
        %p604 = pneg %p603
      $region50: #{tpu_custom_call.1} parent=5 // pred_check_branch
        %606 = sbr.rel (%p604) target = $region52
      $region51: #{tpu_custom_call.1} parent=5 // pred_region
        %s607 = ssub.s32 %s12, 2
      $region52: #{tpu_custom_call.1} parent=5 // pred_fallthru
        _
    $region6: #{tpu_custom_call.1} parent=1 // loop_footer
      %s16 = sadd.s32 1, %s12
    $region7: #{tpu_custom_call.1} parent=1 // loop_footer_branch
      %11 = sbr.rel target = $region3
    $region8: #{tpu_custom_call.1} parent=1 // loop_exit
      _
    %608 = vsyncpa [#allocation3], 1
    %s609 = scalar_lea.sflag [#allocation3], 1
    %610 = vsyncpa %s609, 1
    %611 = vsyncpa [#allocation4], 1
    %s612 = scalar_lea.sflag [#allocation4], 1
    %613 = vsyncpa %s612, 1

</llo_original>
